<compile_context>
chip_gen: v7x
topology: tpu7x:2x2x1
jax: 0.10.0
libtpu: 0.0.40
codegen_flags: <defaults>
</compile_context>

<pallas_src>
import jax
import jax.numpy as jnp
from jax.experimental import pallas as pl
from jax.experimental.pallas import tpu as pltpu


def _round_up(x, m):
    return ((x + m - 1) // m) * m


def critic_kernel(xt_ref, w1_ref, b1_ref, w2_ref, b2_ref, w3_ref, b3_ref, o_ref):
    # xt_ref: (state_dim, TB) f32 — batch on the lane (last) dim.
    xt = xt_ref[...]

    # layer 1: (H, S) @ (S, TB) -> (H, TB); bias broadcast across lanes; ReLU on VPU.
    h1 = jnp.dot(w1_ref[...], xt, preferred_element_type=jnp.float32) + b1_ref[...]
    h1 = jnp.maximum(h1, 0.0)

    # layer 2: (H, H) @ (H, TB) -> (H, TB)
    h2 = jnp.dot(w2_ref[...], h1, preferred_element_type=jnp.float32) + b2_ref[...]
    h2 = jnp.maximum(h2, 0.0)

    # layer 3 (H -> 1): VPU multiply + cross-sublane reduce instead of a 1-row MXU pass.
    # Result is already lane-dense: (1, TB).
    out = jnp.sum(h2 * w3_ref[...], axis=0, keepdims=True) + b3_ref[...]

    o_ref[...] = out.astype(o_ref.dtype)


def critic_forward(state, params, *, tb_max=512):
    """state: [B, state_dim] float32.

    params hold PyTorch-layout weights:
      w1: (H, S)   b1: (H, 1)
      w2: (H, H)   b2: (H, 1)
      w3: (H, 1)   b3: (1, 1)
    Returns [B, 1] float32 (same semantics as the nn.Sequential critic).
    """
    B, S = state.shape
    w1, b1, w2, b2, w3, b3 = (params["w1"], params["b1"], params["w2"],
                              params["b2"], params["w3"], params["b3"])

    # Batch tile: multiple of 128 lanes (full-lane stores), capped at tb_max to
    # bound VMEM; large enough to amortize the ~0.35 us per-grid-step overhead.
    TB = min(tb_max, _round_up(max(B, 1), 128))
    B_pad = _round_up(max(B, 1), TB)
    grid = (B_pad // TB,)

    # Transpose so batch is the lane dimension; zero-pad to the tile boundary.
    xt = jnp.zeros((S, B_pad), state.dtype).at[:, :B].set(state.T)

    resident = lambda shape: pl.BlockSpec(shape, lambda i: (0, 0))  # VMEM-resident weights

    out_t = pl.pallas_call(
        critic_kernel,
        out_shape=jax.ShapeDtypeStruct((1, B_pad), jnp.float32),
        grid_spec=pltpu.PrefetchScalarGridSpec(
            num_scalar_prefetch=0,
            grid=grid,
            in_specs=[
                pl.BlockSpec((S, TB), lambda i: (0, i)),  # activations: streamed per tile
                resident(w1.shape), resident(b1.shape),
                resident(w2.shape), resident(b2.shape),
                resident(w3.shape), resident(b3.shape),
            ],
            out_specs=pl.BlockSpec((1, TB), lambda i: (0, i)),  # lane-dense output tile
        ),
        compiler_params=pltpu.CompilerParams(
            dimension_semantics=("parallel",),      # batch tiles are independent (megacore on v7x)
            vmem_limit_bytes=32 * 1024 * 1024,      # explicit; safe on v7x's 64 MiB VMEM
        ),
    )(xt, w1, b1, w2, b2, w3, b3)

    return out_t[0, :B].reshape(B, 1)


def init_critic_params(key, state_dim, hidden_dim):
    """Deterministic init mimicking PyTorch nn.Linear default (U[-1/sqrt(fan_in), +])."""
    ks = jax.random.split(key, 6)

    def lin(kw, kb, fan_in, fan_out):
        bound = 1.0 / jnp.sqrt(float(fan_in))
        w = jax.random.uniform(kw, (fan_out, fan_in), jnp.float32, -bound, bound)  # PyTorch [out, in]
        b = jax.random.uniform(kb, (fan_out, 1), jnp.float32, -bound, bound)
        return w, b

    w1, b1 = lin(ks[0], ks[1], state_dim, hidden_dim)
    w2, b2 = lin(ks[2], ks[3], hidden_dim, hidden_dim)
    w3, b3 = lin(ks[4], ks[5], hidden_dim, 1)          # w3: (1, H)
    return {"w1": w1, "b1": b1, "w2": w2, "b2": b2,
            "w3": w3.T, "b3": b3}                      # store w3 as (H, 1)


if __name__ == "__main__":
    B, state_dim, hidden_dim = 2, 4, 32

    key = jax.random.PRNGKey(0)
    kp, kx = jax.random.split(key)
    params = init_critic_params(kp, state_dim, hidden_dim)
    state = jax.random.normal(kx, (B, state_dim), jnp.float32)

    out = critic_forward(state, params)
    out = jax.block_until_ready(out)

    # plain-JAX reference with PyTorch nn.Linear semantics: x @ W.T + b
    h1 = jnp.maximum(state @ params["w1"].T + params["b1"][:, 0], 0.0)
    h2 = jnp.maximum(h1 @ params["w2"].T + params["b2"][:, 0], 0.0)
    ref = h2 @ params["w3"] + params["b3"][0]

    assert out.shape == (B, 1)
    assert jnp.allclose(out, ref, atol=1e-5, rtol=1e-5)

    print("KERNEL_OK")
</pallas_src>

<mosaic_0001>
module attributes {stable_mosaic.version = 11 : i64} {
  func.func @critic_kernel(%arg0: i32, %arg1: memref<4x128xf32, #tpu.memory_space<vmem>>, %arg2: memref<32x4xf32, #tpu.memory_space<vmem>>, %arg3: memref<32x1xf32, #tpu.memory_space<vmem>>, %arg4: memref<32x32xf32, #tpu.memory_space<vmem>>, %arg5: memref<32x1xf32, #tpu.memory_space<vmem>>, %arg6: memref<32x1xf32, #tpu.memory_space<vmem>>, %arg7: memref<1x1xf32, #tpu.memory_space<vmem>>, %arg8: memref<1x128xf32, #tpu.memory_space<vmem>>) attributes {dimension_semantics = [#tpu.dimension_semantics<parallel>], iteration_bounds = array<i64: 1>, scalar_prefetch = 0 : i64, scratch_operands = 0 : i64, tpu.core_type = #tpu.core_type<tc>, window_params = [{transform_indices = @transform_0, window_bounds = array<i64: 4, 128>}, {pipeline_mode = #tpu.pipeline_mode<synchronous>, transform_indices = @transform_1, window_bounds = array<i64: 32, 4>}, {pipeline_mode = #tpu.pipeline_mode<synchronous>, transform_indices = @transform_2, window_bounds = array<i64: 32, 1>}, {pipeline_mode = #tpu.pipeline_mode<synchronous>, transform_indices = @transform_3, window_bounds = array<i64: 32, 32>}, {pipeline_mode = #tpu.pipeline_mode<synchronous>, transform_indices = @transform_4, window_bounds = array<i64: 32, 1>}, {pipeline_mode = #tpu.pipeline_mode<synchronous>, transform_indices = @transform_5, window_bounds = array<i64: 32, 1>}, {pipeline_mode = #tpu.pipeline_mode<synchronous>, transform_indices = @transform_6, window_bounds = array<i64: 1, 1>}, {transform_indices = @transform_7, window_bounds = array<i64: 1, 128>}]} {
    %c0 = arith.constant 0 : index
    %c0_0 = arith.constant 0 : index
    %0 = vector.load %arg1[%c0, %c0_0] : memref<4x128xf32, #tpu.memory_space<vmem>>, vector<4x128xf32>
    %c0_1 = arith.constant 0 : index
    %c0_2 = arith.constant 0 : index
    %1 = vector.load %arg2[%c0_1, %c0_2] : memref<32x4xf32, #tpu.memory_space<vmem>>, vector<32x4xf32>
    %cst = arith.constant dense<0.000000e+00> : vector<32x128xf32>
    %2 = tpu.matmul %1, %0, %cst {dimension_numbers = #tpu.dot_dimension_numbers<[1], [0], [0], [1], [0, 0, 1, 1], [], []>} : vector<32x4xf32>, vector<4x128xf32>, vector<32x128xf32> -> vector<32x128xf32>
    %c0_3 = arith.constant 0 : index
    %c0_4 = arith.constant 0 : index
    %3 = vector.load %arg3[%c0_3, %c0_4] : memref<32x1xf32, #tpu.memory_space<vmem>>, vector<32x1xf32>
    %4 = vector.broadcast %3 : vector<32x1xf32> to vector<32x128xf32>
    %5 = arith.addf %2, %4 : vector<32x128xf32>
    %cst_5 = arith.constant 0.000000e+00 : f32
    %6 = vector.broadcast %cst_5 : f32 to vector<32x128xf32>
    %7 = arith.maximumf %5, %6 : vector<32x128xf32>
    %c0_6 = arith.constant 0 : index
    %c0_7 = arith.constant 0 : index
    %8 = vector.load %arg4[%c0_6, %c0_7] : memref<32x32xf32, #tpu.memory_space<vmem>>, vector<32x32xf32>
    %cst_8 = arith.constant dense<0.000000e+00> : vector<32x128xf32>
    %9 = tpu.matmul %8, %7, %cst_8 {dimension_numbers = #tpu.dot_dimension_numbers<[1], [0], [0], [1], [0, 0, 1, 1], [], []>} : vector<32x32xf32>, vector<32x128xf32>, vector<32x128xf32> -> vector<32x128xf32>
    %c0_9 = arith.constant 0 : index
    %c0_10 = arith.constant 0 : index
    %10 = vector.load %arg5[%c0_9, %c0_10] : memref<32x1xf32, #tpu.memory_space<vmem>>, vector<32x1xf32>
    %11 = vector.broadcast %10 : vector<32x1xf32> to vector<32x128xf32>
    %12 = arith.addf %9, %11 : vector<32x128xf32>
    %cst_11 = arith.constant 0.000000e+00 : f32
    %13 = vector.broadcast %cst_11 : f32 to vector<32x128xf32>
    %14 = arith.maximumf %12, %13 : vector<32x128xf32>
    %c0_12 = arith.constant 0 : index
    %c0_13 = arith.constant 0 : index
    %15 = vector.load %arg6[%c0_12, %c0_13] : memref<32x1xf32, #tpu.memory_space<vmem>>, vector<32x1xf32>
    %16 = vector.broadcast %15 : vector<32x1xf32> to vector<32x128xf32>
    %17 = arith.mulf %14, %16 : vector<32x128xf32>
    %cst_14 = arith.constant dense<0.000000e+00> : vector<128xf32>
    %18 = vector.multi_reduction <add>, %17, %cst_14 [0] : vector<32x128xf32> to vector<128xf32>
    %19 = vector.shape_cast %18 : vector<128xf32> to vector<1x128xf32>
    %c0_15 = arith.constant 0 : index
    %c0_16 = arith.constant 0 : index
    %20 = vector.load %arg7[%c0_15, %c0_16] : memref<1x1xf32, #tpu.memory_space<vmem>>, vector<1x1xf32>
    %21 = vector.broadcast %20 : vector<1x1xf32> to vector<1x128xf32>
    %22 = arith.addf %19, %21 : vector<1x128xf32>
    %c0_17 = arith.constant 0 : index
    %c0_18 = arith.constant 0 : index
    %23 = vector.load %arg8[%c0_17, %c0_18] : memref<1x128xf32, #tpu.memory_space<vmem>>, vector<1x128xf32>
    tpu.vector_store %arg8[%c0_17, %c0_18], %22 {strides = array<i32>} : memref<1x128xf32, #tpu.memory_space<vmem>>, vector<1x128xf32>,
    return
  }
  func.func @transform_0(%arg0: i32) -> (i32, i32) {
    %c0_i32 = arith.constant 0 : i32
    %c0_i32_0 = arith.constant 0 : i32
    return %c0_i32, %arg0 : i32, i32
  }
  func.func @transform_1(%arg0: i32) -> (i32, i32) {
    %c0_i32 = arith.constant 0 : i32
    %c0_i32_0 = arith.constant 0 : i32
    %c0_i32_1 = arith.constant 0 : i32
    return %c0_i32, %c0_i32_0 : i32, i32
  }
  func.func @transform_2(%arg0: i32) -> (i32, i32) {
    %c0_i32 = arith.constant 0 : i32
    %c0_i32_0 = arith.constant 0 : i32
    %c0_i32_1 = arith.constant 0 : i32
    return %c0_i32, %c0_i32_0 : i32, i32
  }
  func.func @transform_3(%arg0: i32) -> (i32, i32) {
    %c0_i32 = arith.constant 0 : i32
    %c0_i32_0 = arith.constant 0 : i32
    %c0_i32_1 = arith.constant 0 : i32
    return %c0_i32, %c0_i32_0 : i32, i32
  }
  func.func @transform_4(%arg0: i32) -> (i32, i32) {
    %c0_i32 = arith.constant 0 : i32
    %c0_i32_0 = arith.constant 0 : i32
    %c0_i32_1 = arith.constant 0 : i32
    return %c0_i32, %c0_i32_0 : i32, i32
  }
  func.func @transform_5(%arg0: i32) -> (i32, i32) {
    %c0_i32 = arith.constant 0 : i32
    %c0_i32_0 = arith.constant 0 : i32
    %c0_i32_1 = arith.constant 0 : i32
    return %c0_i32, %c0_i32_0 : i32, i32
  }
  func.func @transform_6(%arg0: i32) -> (i32, i32) {
    %c0_i32 = arith.constant 0 : i32
    %c0_i32_0 = arith.constant 0 : i32
    %c0_i32_1 = arith.constant 0 : i32
    return %c0_i32, %c0_i32_0 : i32, i32
  }
  func.func @transform_7(%arg0: i32) -> (i32, i32) {
    %c0_i32 = arith.constant 0 : i32
    %c0_i32_0 = arith.constant 0 : i32
    return %c0_i32, %arg0 : i32, i32
  }
}

</mosaic_0001>

<llo_original>
// kernel: tpu_custom_call.1
$region0: #{tpu_custom_call.1}
  #allocation0 [shape = 'u32[]', space=smem, size = 0x4, offset = 0x4, fixed_abs, tag = 'smem constant byte address 0x4 - core index']
  #allocation1 [shape = 'u32[144,128]{1,0:T(1,128)}', space=vmem, size = 0x12000, scoped, tag = 'internal scratch']
  #allocation2 [shape = 'f32[1,1]{1,0:T(1,128)S(1)}', space=vmem, size = 0x200, scoped, tag = 'scoped memory for tpu_custom_call.1']
  %s0 = inlined_call_operand.vmem [shape: f32[4,128], index: 0, kind: input, shape index: {}]
  %s1 = inlined_call_operand.vmem [shape: f32[32,4], index: 1, kind: input, shape index: {}]
  %s2 = inlined_call_operand.vmem [shape: f32[32,1], index: 2, kind: input, shape index: {}]
  %s3 = inlined_call_operand.vmem [shape: f32[32,32], index: 3, kind: input, shape index: {}]
  %s4 = inlined_call_operand.vmem [shape: f32[32,1], index: 4, kind: input, shape index: {}]
  %s5 = inlined_call_operand.vmem [shape: f32[32,1], index: 5, kind: input, shape index: {}]
  %s6 = inlined_call_operand.<no memory space> [shape: f32[1,1], index: 6, kind: input, shape index: {}]
  %s7 = inlined_call_operand.hbm [shape: f32[1,128], index: 7, kind: output, shape index: {}]
  %s8 = sld [smem:[#allocation0]]
  $region38: #{tpu_custom_call.1} parent=0
    _
  %s10 = ssub.s32 1, %s8
  %s11 = scalar_select 0, %s10, %s8
  %v12 = vstv %s6
  %13 = vst [vmem:[#allocation2] sm:$0x1] %v12
  $region1: #{tpu_custom_call.1} parent=0
    #allocation3 [shape = 'u8[512]{0}', space=vmem, size = 0x400, scoped, tag = 'output window, operand 0, single buffered']
    #allocation4 [shape = 's32[1]{0}', space=sflag, size = 0x4, scoped, tag = 'scoped memory for tpu_custom_call.1']
    %14 = vsyncpa [#allocation4], 0
    // Predicated region
    $region2: #{tpu_custom_call.1} parent=1 // pred_check
      _
    $region3: #{tpu_custom_call.1} parent=1 // pred_check_branch
      %16 = sbr.rel (0) target = $region5
    $region4: #{tpu_custom_call.1} parent=1 // pred_region
      _
    $region5: #{tpu_custom_call.1} parent=1 // pred_fallthru
      _
    // Predicated region
    $region6: #{tpu_custom_call.1} parent=1 // pred_check
      _
    $region7: #{tpu_custom_call.1} parent=1 // pred_check_branch
      %18 = sbr.rel (0) target = $region9
    $region8: #{tpu_custom_call.1} parent=1 // pred_region
      _
    $region9: #{tpu_custom_call.1} parent=1 // pred_fallthru
      _
    // Predicated region
    $region10: #{tpu_custom_call.1} parent=1 // pred_check
      _
    $region11: #{tpu_custom_call.1} parent=1 // pred_check_branch
      %20 = sbr.rel (0) target = $region13
    $region12: #{tpu_custom_call.1} parent=1 // pred_region
      _
    $region13: #{tpu_custom_call.1} parent=1 // pred_fallthru
      _
    // Predicated region
    $region14: #{tpu_custom_call.1} parent=1 // pred_check
      _
    $region15: #{tpu_custom_call.1} parent=1 // pred_check_branch
      %22 = sbr.rel (0) target = $region17
    $region16: #{tpu_custom_call.1} parent=1 // pred_region
      _
    $region17: #{tpu_custom_call.1} parent=1 // pred_fallthru
      _
    // Predicated region
    $region18: #{tpu_custom_call.1} parent=1 // pred_check
      _
    $region19: #{tpu_custom_call.1} parent=1 // pred_check_branch
      %24 = sbr.rel (0) target = $region21
    $region20: #{tpu_custom_call.1} parent=1 // pred_region
      _
    $region21: #{tpu_custom_call.1} parent=1 // pred_fallthru
      _
    // Predicated region
    $region22: #{tpu_custom_call.1} parent=1 // pred_check
      _
    $region23: #{tpu_custom_call.1} parent=1 // pred_check_branch
      %26 = sbr.rel (0) target = $region25
    $region24: #{tpu_custom_call.1} parent=1 // pred_region
      _
    $region25: #{tpu_custom_call.1} parent=1 // pred_fallthru
      _
    // Predicated region
    $region26: #{tpu_custom_call.1} parent=1 // pred_check
      _
    $region27: #{tpu_custom_call.1} parent=1 // pred_check_branch
      %28 = sbr.rel (0) target = $region29
    $region28: #{tpu_custom_call.1} parent=1 // pred_region
      _
    $region29: #{tpu_custom_call.1} parent=1 // pred_fallthru
      _
    %v29 = vld [vmem:[%s0] sm:$0xf]
    %v30 = vld [vmem:[%s1] sm:$0xff]
    %v31 = vld [vmem:[%s1 + $0x8] sm:$0xff]
    %v32 = vld [vmem:[%s1 + $0x10] sm:$0xff]
    %v33 = vld [vmem:[%s1 + $0x18] sm:$0xff]
    %v34 = vld [vmem:[%s2] sm:$0xff]
    %v35 = vld [vmem:[%s2 + $0x8] sm:$0xff]
    %v36 = vld [vmem:[%s2 + $0x10] sm:$0xff]
    %v37 = vld [vmem:[%s2 + $0x18] sm:$0xff]
    %39 = vset.pattern.permute.xlu0 0
    %40 = vperm.xlu0 %39, %v34
    %v41 = vpop.permute.xlu0 %40
    %44 = vset.pattern.permute.xlu0 0
    %45 = vperm.xlu0 %44, %v35
    %v46 = vpop.permute.xlu0 %45
    %49 = vset.pattern.permute.xlu0 0
    %50 = vperm.xlu0 %49, %v36
    %v51 = vpop.permute.xlu0 %50
    %54 = vset.pattern.permute.xlu0 0
    %55 = vperm.xlu0 %54, %v37
    %v56 = vpop.permute.xlu0 %55
    %vm58 = vcmask 31744
    %v60 = vsel %vm58, %v30, 0
    %v63 = vsel %vm58, %v31, 0
    %v66 = vsel %vm58, %v32, 0
    %v69 = vsel %vm58, %v33, 0
    %vm71 = vcmask 1043456
    %v73 = vsel %vm71, %v29, 0
    %75 = vmatprep.subr.mxu0 0.0
    %76 = vmatpush1.msra.mxu0 %v73
    %77 = vmatprep.subr.mxu0 0.0
    %78 = vmatpush1.msra.mxu0 0.0
    %79 = vmatprep.subr.mxu0 0.0
    %80 = vmatpush1.msra.mxu0 0.0
    %81 = vmatprep.subr.mxu0 0.0
    %82 = vmatpush1.msra.mxu0 0.0
    %83 = vmatprep.subr.mxu0 0.0
    %84 = vmatpush1.msra.mxu0 0.0
    %85 = vmatprep.subr.mxu0 0.0
    %86 = vmatpush1.msra.mxu0 0.0
    %87 = vmatprep.subr.mxu0 0.0
    %88 = vmatpush1.msra.mxu0 0.0
    %89 = vmatprep.subr.mxu0 0.0
    %90 = vmatpush1.msra.mxu0 0.0
    %91 = vmatprep.subr.mxu0 0.0
    %92 = vmatpush1.msra.mxu0 0.0
    %93 = vmatprep.subr.mxu0 0.0
    %94 = vmatpush1.msra.mxu0 0.0
    %95 = vmatprep.subr.mxu0 0.0
    %96 = vmatpush1.msra.mxu0 0.0
    %97 = vmatprep.subr.mxu0 0.0
    %98 = vmatpush1.msra.mxu0 0.0
    %99 = vmatprep.subr.mxu0 0.0
    %100 = vmatpush1.msra.mxu0 0.0
    %101 = vmatprep.subr.mxu0 0.0
    %102 = vmatpush1.msra.mxu0 0.0
    %103 = vmatprep.subr.mxu0 0.0
    %104 = vmatpush1.msra.mxu0 0.0
    %105 = vmatprep.subr.mxu0 0.0
    %106 = vmatpush1.msra.mxu0 0.0
    %107 = vmatprep.subr.mxu0 0.0
    %108 = vmatpush1.msra.mxu0 0.0
    %109 = vmatprep.subr.mxu0 0.0
    %110 = vmatpush1.msra.mxu0 0.0
    %111 = vmatprep.subr.mxu0 0.0
    %112 = vmatpush1.msra.mxu0 0.0
    %113 = vmatprep.subr.mxu0 0.0
    %114 = vmatpush1.msra.mxu0 0.0
    %115 = vmatprep.subr.mxu0 0.0
    %116 = vmatpush1.msra.mxu0 0.0
    %117 = vmatprep.subr.mxu0 0.0
    %118 = vmatpush1.msra.mxu0 0.0
    %119 = vmatprep.subr.mxu0 0.0
    %120 = vmatpush1.msra.mxu0 0.0
    %121 = vmatprep.subr.mxu0 0.0
    %122 = vmatpush1.msra.mxu0 0.0
    %123 = vmatprep.subr.mxu0 0.0
    %124 = vmatpush1.msra.mxu0 0.0
    %125 = vmatprep.subr.mxu0 0.0
    %126 = vmatpush1.msra.mxu0 0.0
    %127 = vmatprep.subr.mxu0 0.0
    %128 = vmatpush1.msra.mxu0 0.0
    %129 = vmatprep.subr.mxu0 0.0
    %130 = vmatpush1.msra.mxu0 0.0
    %131 = vmatprep.subr.mxu0 0.0
    %132 = vmatpush1.msra.mxu0 0.0
    %133 = vmatprep.subr.mxu0 0.0
    %134 = vmatpush1.msra.mxu0 0.0
    %135 = vmatprep.subr.mxu0 0.0
    %136 = vmatpush1.msra.mxu0 0.0
    %137 = vmatprep.subr.mxu0 0.0
    %138 = vmatpush1.msra.mxu0 0.0
    %139 = vmatprep.mubr.f32.mxu0 0.0
    %140 = vmatmul.mubr.f32.gmra.mrb[0].mxu0 %v60
    %v141 = vpop.f32.mrb[0].mxu0
    %v142 = vadd.f32 %v41, %v141
    %v143 = vpop.f32.mrb[0].mxu0
    %144 = vmatprep.mubr.f32.mxu0 0.0
    %145 = vmatmul.mubr.f32.gmra.mrb[0].mxu0 %v63
    %v146 = vpop.f32.mrb[0].mxu0
    %v147 = vadd.f32 %v46, %v146
    %v148 = vpop.f32.mrb[0].mxu0
    %149 = vmatprep.mubr.f32.mxu0 0.0
    %150 = vmatmul.mubr.f32.gmra.mrb[0].mxu0 %v66
    %v151 = vpop.f32.mrb[0].mxu0
    %v152 = vadd.f32 %v51, %v151
    %v153 = vpop.f32.mrb[0].mxu0
    %154 = vmatprep.mubr.f32.mxu0 0.0
    %155 = vmatmul.mubr.f32.gmra.mrb[0].mxu0 %v69
    %v156 = vpop.f32.mrb[0].mxu0
    %v157 = vadd.f32 %v56, %v156
    %v158 = vpop.f32.mrb[0].mxu0
    %159 = vdwg.mxu0
    %v160 = vmax.f32 %v142, 0.0
    %v161 = vmax.f32 %v147, 0.0
    %v162 = vmax.f32 %v152, 0.0
    %v163 = vmax.f32 %v157, 0.0
    %v164 = vld [vmem:[%s3] sm:$0xff]
    %v165 = vld [vmem:[%s3 + $0x8] sm:$0xff]
    %v166 = vld [vmem:[%s3 + $0x10] sm:$0xff]
    %v167 = vld [vmem:[%s3 + $0x18] sm:$0xff]
    %v168 = vld [vmem:[%s4] sm:$0xff]
    %v169 = vld [vmem:[%s4 + $0x8] sm:$0xff]
    %v170 = vld [vmem:[%s4 + $0x10] sm:$0xff]
    %v171 = vld [vmem:[%s4 + $0x18] sm:$0xff]
    %173 = vset.pattern.permute.xlu0 0
    %174 = vperm.xlu0 %173, %v168
    %v175 = vpop.permute.xlu0 %174
    %178 = vset.pattern.permute.xlu0 0
    %179 = vperm.xlu0 %178, %v169
    %v180 = vpop.permute.xlu0 %179
    %183 = vset.pattern.permute.xlu0 0
    %184 = vperm.xlu0 %183, %v170
    %v185 = vpop.permute.xlu0 %184
    %188 = vset.pattern.permute.xlu0 0
    %189 = vperm.xlu0 %188, %v171
    %v190 = vpop.permute.xlu0 %189
    %vm192 = vcmask 261120
    %v194 = vsel %vm192, %v164, 0
    %v197 = vsel %vm192, %v165, 0
    %v200 = vsel %vm192, %v166, 0
    %v203 = vsel %vm192, %v167, 0
    %205 = vmatprep.subr.mxu0 0.0
    %206 = vmatpush1.msra.mxu0 %v160
    %207 = vmatprep.subr.mxu0 0.0
    %208 = vmatpush1.msra.mxu0 %v161
    %209 = vmatprep.subr.mxu0 0.0
    %210 = vmatpush1.msra.mxu0 %v162
    %211 = vmatprep.subr.mxu0 0.0
    %212 = vmatpush1.msra.mxu0 %v163
    %213 = vmatprep.subr.mxu0 0.0
    %214 = vmatpush1.msra.mxu0 0.0
    %215 = vmatprep.subr.mxu0 0.0
    %216 = vmatpush1.msra.mxu0 0.0
    %217 = vmatprep.subr.mxu0 0.0
    %218 = vmatpush1.msra.mxu0 0.0
    %219 = vmatprep.subr.mxu0 0.0
    %220 = vmatpush1.msra.mxu0 0.0
    %221 = vmatprep.subr.mxu0 0.0
    %222 = vmatpush1.msra.mxu0 0.0
    %223 = vmatprep.subr.mxu0 0.0
    %224 = vmatpush1.msra.mxu0 0.0
    %225 = vmatprep.subr.mxu0 0.0
    %226 = vmatpush1.msra.mxu0 0.0
    %227 = vmatprep.subr.mxu0 0.0
    %228 = vmatpush1.msra.mxu0 0.0
    %229 = vmatprep.subr.mxu0 0.0
    %230 = vmatpush1.msra.mxu0 0.0
    %231 = vmatprep.subr.mxu0 0.0
    %232 = vmatpush1.msra.mxu0 0.0
    %233 = vmatprep.subr.mxu0 0.0
    %234 = vmatpush1.msra.mxu0 0.0
    %235 = vmatprep.subr.mxu0 0.0
    %236 = vmatpush1.msra.mxu0 0.0
    %237 = vmatprep.subr.mxu0 0.0
    %238 = vmatpush1.msra.mxu0 0.0
    %239 = vmatprep.subr.mxu0 0.0
    %240 = vmatpush1.msra.mxu0 0.0
    %241 = vmatprep.subr.mxu0 0.0
    %242 = vmatpush1.msra.mxu0 0.0
    %243 = vmatprep.subr.mxu0 0.0
    %244 = vmatpush1.msra.mxu0 0.0
    %245 = vmatprep.subr.mxu0 0.0
    %246 = vmatpush1.msra.mxu0 0.0
    %247 = vmatprep.subr.mxu0 0.0
    %248 = vmatpush1.msra.mxu0 0.0
    %249 = vmatprep.subr.mxu0 0.0
    %250 = vmatpush1.msra.mxu0 0.0
    %251 = vmatprep.subr.mxu0 0.0
    %252 = vmatpush1.msra.mxu0 0.0
    %253 = vmatprep.subr.mxu0 0.0
    %254 = vmatpush1.msra.mxu0 0.0
    %255 = vmatprep.subr.mxu0 0.0
    %256 = vmatpush1.msra.mxu0 0.0
    %257 = vmatprep.subr.mxu0 0.0
    %258 = vmatpush1.msra.mxu0 0.0
    %259 = vmatprep.subr.mxu0 0.0
    %260 = vmatpush1.msra.mxu0 0.0
    %261 = vmatprep.subr.mxu0 0.0
    %262 = vmatpush1.msra.mxu0 0.0
    %263 = vmatprep.subr.mxu0 0.0
    %264 = vmatpush1.msra.mxu0 0.0
    %265 = vmatprep.subr.mxu0 0.0
    %266 = vmatpush1.msra.mxu0 0.0
    %267 = vmatprep.subr.mxu0 0.0
    %268 = vmatpush1.msra.mxu0 0.0
    %269 = vmatprep.mubr.f32.mxu0 0.0
    %270 = vmatmul.mubr.f32.gmra.mrb[0].mxu0 %v194
    %v271 = vpop.f32.mrb[0].mxu0
    %v272 = vadd.f32 %v175, %v271
    %v273 = vpop.f32.mrb[0].mxu0
    %274 = vmatprep.mubr.f32.mxu0 0.0
    %275 = vmatmul.mubr.f32.gmra.mrb[0].mxu0 %v197
    %v276 = vpop.f32.mrb[0].mxu0
    %v277 = vadd.f32 %v180, %v276
    %v278 = vpop.f32.mrb[0].mxu0
    %279 = vmatprep.mubr.f32.mxu0 0.0
    %280 = vmatmul.mubr.f32.gmra.mrb[0].mxu0 %v200
    %v281 = vpop.f32.mrb[0].mxu0
    %v282 = vadd.f32 %v185, %v281
    %v283 = vpop.f32.mrb[0].mxu0
    %284 = vmatprep.mubr.f32.mxu0 0.0
    %285 = vmatmul.mubr.f32.gmra.mrb[0].mxu0 %v203
    %v286 = vpop.f32.mrb[0].mxu0
    %v287 = vadd.f32 %v190, %v286
    %v288 = vpop.f32.mrb[0].mxu0
    %289 = vdwg.mxu0
    %v290 = vmax.f32 %v272, 0.0
    %v291 = vmax.f32 %v277, 0.0
    %v292 = vmax.f32 %v282, 0.0
    %v293 = vmax.f32 %v287, 0.0
    %v294 = vld [vmem:[%s5] sm:$0xff]
    %v295 = vld [vmem:[%s5 + $0x8] sm:$0xff]
    %v296 = vld [vmem:[%s5 + $0x10] sm:$0xff]
    %v297 = vld [vmem:[%s5 + $0x18] sm:$0xff]
    %299 = vset.pattern.permute.xlu0 0
    %300 = vperm.xlu0 %299, %v294
    %v301 = vpop.permute.xlu0 %300
    %304 = vset.pattern.permute.xlu0 0
    %305 = vperm.xlu0 %304, %v295
    %v306 = vpop.permute.xlu0 %305
    %309 = vset.pattern.permute.xlu0 0
    %310 = vperm.xlu0 %309, %v296
    %v311 = vpop.permute.xlu0 %310
    %314 = vset.pattern.permute.xlu0 0
    %315 = vperm.xlu0 %314, %v297
    %v316 = vpop.permute.xlu0 %315
    %v318 = vmul.f32 %v290, %v301
    %v319 = vmul.f32 %v291, %v306
    %v320 = vmul.f32 %v292, %v311
    %v321 = vmul.f32 %v293, %v316
    %v322 = vadd.f32 %v318, %v319
    %v323 = vadd.f32 %v322, %v320
    %v324 = vadd.f32 %v323, %v321
    %v325 = vrot.slane %v324, 4
    %v326 = vadd.f32 %v324, %v325
    %v327 = vrot.slane %v326, 2
    %v328 = vadd.f32 %v326, %v327
    %v329 = vrot.slane %v328, 1
    %v330 = vadd.f32 %v328, %v329
    %v331 = vld [vmem:[#allocation2] sm:$0x1]
    %333 = vset.pattern.permute.xlu0 0
    %334 = vperm.xlu0 %333, %v331
    %v335 = vpop.permute.xlu0 %334
    %v337 = vlaneseq
    %v338 = vshrl.u32 %v337, 7
    %v339 = vsub.s32 0, %v338
    %v340 = vrot.slane %v335, %v339
    %v341 = vadd.f32 %v330, %v340
    %342 = vst [vmem:[#allocation3] sm:$0x1] %v341
    // Predicated region
    $region30: #{tpu_custom_call.1} parent=1 // pred_check
      _
    $region31: #{tpu_custom_call.1} parent=1 // pred_check_branch
      %344 = sbr.rel (0) target = $region33
    $region32: #{tpu_custom_call.1} parent=1 // pred_region
      %s346 = ssub.s32 16, 16
      %347 = vsyncadd [#allocation4], %s346
      %s349 = sshll.u32 [#allocation3], 4
      %s350 = int_to_ptr.vmem [resolvable:$true] %s349
      %352 = dma.vmem_to_hbm [thread:$0]  %s350, 16, %s7, [#allocation4]
    $region33: #{tpu_custom_call.1} parent=1 // pred_fallthru
      _
    // Predicated region
    $region34: #{tpu_custom_call.1} parent=1 // pred_check
      _
    $region35: #{tpu_custom_call.1} parent=1 // pred_check_branch
      %354 = sbr.rel (0) target = $region37
    $region36: #{tpu_custom_call.1} parent=1 // pred_region
      %355 = dma.done [#allocation4], 16
    $region37: #{tpu_custom_call.1} parent=1 // pred_fallthru
      _
    %356 = vsyncpa [#allocation4], 1

</llo_original>
